<compile_context>
chip_gen: v7x
topology: tpu7x:2x2x1
jax: 0.10.0
libtpu: 0.0.40
codegen_flags: <defaults>
</compile_context>

<pallas_src>
import functools

import jax
import jax.numpy as jnp
import numpy as np
from jax import lax
from jax.experimental import pallas as pl
from jax.experimental.pallas import tpu as pltpu


def conf_scorer_kernel(x_ref, wc_ref, w1_ref, w2_ref, p_ref, out_ref):
    # x_ref  : (1, k*C_in, L)  bf16  im2col input, channels-first, L lanes
    # wc_ref : (C_out, k*C_in) bf16  conv weight (taps folded into K)
    # w1_ref : (H, C_out)      bf16  MLP layer 0
    # w2_ref : (H, H)          bf16  MLP layer 1
    # p_ref  : (C_out+3H+1, 1) f32   packed [bc; b1; b2; w3; b3] column
    # out_ref: (1, 1, L)       f32   scores, lane-dense
    c_out = wc_ref.shape[0]
    h = w1_ref.shape[0]

    bc = p_ref[0:c_out, :]                              # (C_out, 1)
    b1 = p_ref[c_out:c_out + h, :]                      # (H, 1)
    b2 = p_ref[c_out + h:c_out + 2 * h, :]              # (H, 1)
    w3 = p_ref[c_out + 2 * h:c_out + 3 * h, :]          # (H, 1)
    b3 = p_ref[c_out + 3 * h:c_out + 3 * h + 1, :]      # (1, 1)

    x = x_ref[0]                                        # (k*C_in, L) bf16

    # temporal conv: single K = k*C_in contraction on the MXU, f32 accumulate
    y = jnp.dot(wc_ref[...], x, preferred_element_type=jnp.float32)
    y = jnp.maximum(y + bc, 0.0)                        # (C_out, L) f32

    # MLP hidden layers (bf16 MXU inputs, f32 accumulation, f32 bias/ReLU)
    h1 = jnp.dot(w1_ref[...], y.astype(jnp.bfloat16),
                 preferred_element_type=jnp.float32)
    h1 = jnp.maximum(h1 + b1, 0.0)                      # (H, L)
    h2 = jnp.dot(w2_ref[...], h1.astype(jnp.bfloat16),
                 preferred_element_type=jnp.float32)
    h2 = jnp.maximum(h2 + b2, 0.0)                      # (H, L)

    # final 1-wide projection: VPU multiply + XLU sublane reduce -> (1, L)
    score = jnp.sum(h2 * w3, axis=0, keepdims=True) + b3
    out_ref[0] = score.astype(out_ref.dtype)


@functools.partial(jax.jit, static_argnames=("block_b",))
def confidence_scorer(x, wc_t, bc, w1_t, b1, w2_t, b2, w3_t, b3, *, block_b=1):
    """ConfidenceScorer forward.

    x    : (B, T, C_in) f32
    wc_t : (C_out, C_in, 1, K) Conv2d weight (PyTorch layout); bc: (C_out,)
    w1_t : (H, C_out), b1: (H,)  -- MLP layer 0 (PyTorch Linear layout)
    w2_t : (H, H),     b2: (H,)  -- MLP layer 1
    w3_t : (1, H),     b3: (1,)  -- MLP layer 2 (no activation)
    returns (B, T, 1) f32
    """
    B, T, C_in = x.shape
    C_out, _, _, K = wc_t.shape
    H = w1_t.shape[0]
    assert B % block_b == 0, "block_b must divide the batch size"
    G = B // block_b
    L = block_b * T
    pad = K // 2                      # matches Conv2d padding=(0, K//2), K odd

    # --- wrapper-side layout plumbing (cheap XLA ops, outside the kernel) ---
    # channels-first + same padding + im2col over the taps -> (B, K*C_in, T)
    xc = jnp.transpose(x, (0, 2, 1))                               # (B, C_in, T)
    xp = jnp.pad(xc, ((0, 0), (0, 0), (pad, pad)))                 # (B, C_in, T+2p)
    xim = jnp.stack([xp[:, :, j:j + T] for j in range(K)], axis=1)  # (B,K,C_in,T)
    xim = xim.reshape(B, K * C_in, T)
    # group block_b consecutive batch elements along lanes: (G, K*C_in, L)
    xim = xim.reshape(G, block_b, K * C_in, T).transpose(0, 2, 1, 3)
    xim = xim.reshape(G, K * C_in, L).astype(jnp.bfloat16)

    # conv weight -> (C_out, K*C_in), row order tap-major to match the im2col
    wc = jnp.transpose(wc_t[:, :, 0, :], (0, 2, 1)).reshape(C_out, K * C_in)
    wc = wc.astype(jnp.bfloat16)
    w1 = w1_t.astype(jnp.bfloat16)                                 # (H, C_out)
    w2 = w2_t.astype(jnp.bfloat16)                                 # (H, H)

    # pack the five tiny constants into a single f32 column operand
    params = jnp.concatenate([
        bc.reshape(-1), b1.reshape(-1), b2.reshape(-1),
        w3_t.reshape(-1), b3.reshape(-1)]).astype(jnp.float32).reshape(-1, 1)

    const2 = lambda g: (0, 0)
    out = pl.pallas_call(
        conf_scorer_kernel,
        out_shape=jax.ShapeDtypeStruct((G, 1, L), jnp.float32),
        grid_spec=pltpu.PrefetchScalarGridSpec(
            num_scalar_prefetch=0,
            grid=(G,),
            in_specs=[
                pl.BlockSpec((1, K * C_in, L), lambda g: (g, 0, 0)),  # x im2col
                pl.BlockSpec((C_out, K * C_in), const2),              # conv W
                pl.BlockSpec((H, C_out), const2),                     # W1
                pl.BlockSpec((H, H), const2),                         # W2
                pl.BlockSpec(params.shape, const2),                   # packed consts
            ],
            out_specs=pl.BlockSpec((1, 1, L), lambda g: (g, 0, 0)),
        ),
        compiler_params=pltpu.CompilerParams(
            dimension_semantics=("parallel",),
        ),
    )(xim, wc, w1, w2, params)

    # (G, 1, block_b*T) -> (B, T, 1)
    return out.reshape(G, block_b, T).reshape(B, T)[..., None]


def reference_scorer(x, wc_t, bc, w1_t, b1, w2_t, b2, w3_t, b3,
                     mirror_bf16=True):
    """Pure-JAX mirror of the PyTorch forward (1 conv layer, 3 MLP layers).

    With mirror_bf16=True the matmul inputs are rounded to bf16 exactly like
    the kernel feeds the MXU (accumulation stays f32), so the comparison
    tolerance can stay tight.
    """
    hp = lax.Precision.HIGHEST
    cast = ((lambda a: a.astype(jnp.bfloat16).astype(jnp.float32))
            if mirror_bf16 else (lambda a: a))
    K = wc_t.shape[-1]
    pad = K // 2
    w_wio = jnp.transpose(wc_t[:, :, 0, :], (2, 1, 0))            # (K, C_in, C_out)
    y = lax.conv_general_dilated(
        cast(x), cast(w_wio), window_strides=(1,), padding=[(pad, pad)],
        dimension_numbers=("NWC", "WIO", "NWC"), precision=hp)
    y = jax.nn.relu(y + bc[None, None, :])
    h1 = jax.nn.relu(jnp.dot(cast(y), cast(w1_t.T), precision=hp) + b1)
    h2 = jax.nn.relu(jnp.dot(cast(h1), cast(w2_t.T), precision=hp) + b2)
    return jnp.dot(h2, w3_t.T, precision=hp) + b3


if __name__ == "__main__":
    # Shapes consistent with ConfidenceScorer(32, 32, (1, 5)); T = 128 lanes.
    B, T = 2, 128
    C_in, C_out, K = 32, 32, 5
    H = C_out // 2

    key = jax.random.PRNGKey(0)
    ks = jax.random.split(key, 9)

    wc_t = jax.random.normal(ks[0], (C_out, C_in, 1, K), jnp.float32) * 0.1
    bc = jax.random.normal(ks[1], (C_out,), jnp.float32) * 0.1
    w1_t = jax.random.normal(ks[2], (H, C_out), jnp.float32) * 0.1
    b1 = jax.random.normal(ks[3], (H,), jnp.float32) * 0.1
    w2_t = jax.random.normal(ks[4], (H, H), jnp.float32) * 0.1
    b2 = jax.random.normal(ks[5], (H,), jnp.float32) * 0.1
    w3_t = jax.random.normal(ks[6], (1, H), jnp.float32) * 0.1
    b3 = jax.random.normal(ks[7], (1,), jnp.float32) * 0.1
    x = jax.random.normal(ks[8], (B, T, C_in), jnp.float32)

    ref = reference_scorer(x, wc_t, bc, w1_t, b1, w2_t, b2, w3_t, b3)

    # block_b=1 keeps 2 parallel grid steps (both v7x TensorCores busy);
    # block_b=2 packs the whole batch into one lane-dense step (v6e-style).
    for block_b in (1, 2):
        out = confidence_scorer(x, wc_t, bc, w1_t, b1, w2_t, b2, w3_t, b3,
                                block_b=block_b)
        out = jax.block_until_ready(out)
        assert out.shape == (B, T, 1)
        np.testing.assert_allclose(np.asarray(out), np.asarray(ref),
                                   rtol=5e-3, atol=5e-3)

    print("KERNEL_OK")
</pallas_src>

<mosaic_0001>
module attributes {stable_mosaic.version = 11 : i64} {
  func.func @conf_scorer_kernel(%arg0: i32, %arg1: memref<1x160x128xbf16, #tpu.memory_space<vmem>>, %arg2: memref<32x160xbf16, #tpu.memory_space<vmem>>, %arg3: memref<16x32xbf16, #tpu.memory_space<vmem>>, %arg4: memref<16x16xbf16, #tpu.memory_space<vmem>>, %arg5: memref<81x1xf32, #tpu.memory_space<vmem>>, %arg6: memref<1x1x128xf32, #tpu.memory_space<vmem>>) attributes {dimension_semantics = [#tpu.dimension_semantics<parallel>], iteration_bounds = array<i64: 2>, scalar_prefetch = 0 : i64, scratch_operands = 0 : i64, tpu.core_type = #tpu.core_type<tc>, window_params = [{transform_indices = @transform_0, window_bounds = array<i64: 1, 160, 128>}, {pipeline_mode = #tpu.pipeline_mode<synchronous>, transform_indices = @transform_1, window_bounds = array<i64: 32, 160>}, {pipeline_mode = #tpu.pipeline_mode<synchronous>, transform_indices = @transform_2, window_bounds = array<i64: 16, 32>}, {pipeline_mode = #tpu.pipeline_mode<synchronous>, transform_indices = @transform_3, window_bounds = array<i64: 16, 16>}, {pipeline_mode = #tpu.pipeline_mode<synchronous>, transform_indices = @transform_4, window_bounds = array<i64: 81, 1>}, {transform_indices = @transform_5, window_bounds = array<i64: 1, 1, 128>}]} {
    %c0 = arith.constant 0 : index
    %c0_0 = arith.constant 0 : index
    %0 = vector.load %arg5[%c0, %c0_0] : memref<81x1xf32, #tpu.memory_space<vmem>>, vector<32x1xf32>
    %c32 = arith.constant 32 : index
    %c0_1 = arith.constant 0 : index
    %1 = vector.load %arg5[%c32, %c0_1] : memref<81x1xf32, #tpu.memory_space<vmem>>, vector<16x1xf32>
    %c48 = arith.constant 48 : index
    %c0_2 = arith.constant 0 : index
    %2 = vector.load %arg5[%c48, %c0_2] : memref<81x1xf32, #tpu.memory_space<vmem>>, vector<16x1xf32>
    %c64 = arith.constant 64 : index
    %c0_3 = arith.constant 0 : index
    %3 = vector.load %arg5[%c64, %c0_3] : memref<81x1xf32, #tpu.memory_space<vmem>>, vector<16x1xf32>
    %c80 = arith.constant 80 : index
    %c0_4 = arith.constant 0 : index
    %4 = vector.load %arg5[%c80, %c0_4] : memref<81x1xf32, #tpu.memory_space<vmem>>, vector<1x1xf32>
    %c0_5 = arith.constant 0 : index
    %c0_6 = arith.constant 0 : index
    %c0_7 = arith.constant 0 : index
    %5 = vector.load %arg1[%c0_5, %c0_6, %c0_7] : memref<1x160x128xbf16, #tpu.memory_space<vmem>>, vector<1x160x128xbf16>
    %6 = vector.shape_cast %5 : vector<1x160x128xbf16> to vector<160x128xbf16>
    %c0_8 = arith.constant 0 : index
    %c0_9 = arith.constant 0 : index
    %7 = vector.load %arg2[%c0_8, %c0_9] : memref<32x160xbf16, #tpu.memory_space<vmem>>, vector<32x160xbf16>
    %cst = arith.constant dense<0.000000e+00> : vector<32x128xf32>
    %8 = tpu.matmul %7, %6, %cst {dimension_numbers = #tpu.dot_dimension_numbers<[1], [0], [0], [1], [0, 0, 1, 1], [], []>} : vector<32x160xbf16>, vector<160x128xbf16>, vector<32x128xf32> -> vector<32x128xf32>
    %9 = vector.broadcast %0 : vector<32x1xf32> to vector<32x128xf32>
    %10 = arith.addf %8, %9 : vector<32x128xf32>
    %cst_10 = arith.constant 0.000000e+00 : f32
    %11 = vector.broadcast %cst_10 : f32 to vector<32x128xf32>
    %12 = arith.maximumf %10, %11 : vector<32x128xf32>
    %c0_11 = arith.constant 0 : index
    %c0_12 = arith.constant 0 : index
    %13 = vector.load %arg3[%c0_11, %c0_12] : memref<16x32xbf16, #tpu.memory_space<vmem>>, vector<16x32xbf16>
    %14 = arith.truncf %12 : vector<32x128xf32> to vector<32x128xbf16>
    %cst_13 = arith.constant dense<0.000000e+00> : vector<16x128xf32>
    %15 = tpu.matmul %13, %14, %cst_13 {dimension_numbers = #tpu.dot_dimension_numbers<[1], [0], [0], [1], [0, 0, 1, 1], [], []>} : vector<16x32xbf16>, vector<32x128xbf16>, vector<16x128xf32> -> vector<16x128xf32>
    %16 = vector.broadcast %1 : vector<16x1xf32> to vector<16x128xf32>
    %17 = arith.addf %15, %16 : vector<16x128xf32>
    %cst_14 = arith.constant 0.000000e+00 : f32
    %18 = vector.broadcast %cst_14 : f32 to vector<16x128xf32>
    %19 = arith.maximumf %17, %18 : vector<16x128xf32>
    %c0_15 = arith.constant 0 : index
    %c0_16 = arith.constant 0 : index
    %20 = vector.load %arg4[%c0_15, %c0_16] : memref<16x16xbf16, #tpu.memory_space<vmem>>, vector<16x16xbf16>
    %21 = arith.truncf %19 : vector<16x128xf32> to vector<16x128xbf16>
    %cst_17 = arith.constant dense<0.000000e+00> : vector<16x128xf32>
    %22 = tpu.matmul %20, %21, %cst_17 {dimension_numbers = #tpu.dot_dimension_numbers<[1], [0], [0], [1], [0, 0, 1, 1], [], []>} : vector<16x16xbf16>, vector<16x128xbf16>, vector<16x128xf32> -> vector<16x128xf32>
    %23 = vector.broadcast %2 : vector<16x1xf32> to vector<16x128xf32>
    %24 = arith.addf %22, %23 : vector<16x128xf32>
    %cst_18 = arith.constant 0.000000e+00 : f32
    %25 = vector.broadcast %cst_18 : f32 to vector<16x128xf32>
    %26 = arith.maximumf %24, %25 : vector<16x128xf32>
    %27 = vector.broadcast %3 : vector<16x1xf32> to vector<16x128xf32>
    %28 = arith.mulf %26, %27 : vector<16x128xf32>
    %cst_19 = arith.constant dense<0.000000e+00> : vector<128xf32>
    %29 = vector.multi_reduction <add>, %28, %cst_19 [0] : vector<16x128xf32> to vector<128xf32>
    %30 = vector.shape_cast %29 : vector<128xf32> to vector<1x128xf32>
    %31 = vector.broadcast %4 : vector<1x1xf32> to vector<1x128xf32>
    %32 = arith.addf %30, %31 : vector<1x128xf32>
    %c0_20 = arith.constant 0 : index
    %c0_21 = arith.constant 0 : index
    %c0_22 = arith.constant 0 : index
    %33 = vector.load %arg6[%c0_20, %c0_21, %c0_22] : memref<1x1x128xf32, #tpu.memory_space<vmem>>, vector<1x1x128xf32>
    %34 = vector.shape_cast %33 : vector<1x1x128xf32> to vector<1x128xf32>
    %35 = vector.shape_cast %32 : vector<1x128xf32> to vector<1x1x128xf32>
    tpu.vector_store %arg6[%c0_20, %c0_21, %c0_22], %35 {strides = array<i32>} : memref<1x1x128xf32, #tpu.memory_space<vmem>>, vector<1x1x128xf32>,
    return
  }
  func.func @transform_0(%arg0: i32) -> (i32, i32, i32) {
    %c0_i32 = arith.constant 0 : i32
    %c0_i32_0 = arith.constant 0 : i32
    %c0_i32_1 = arith.constant 0 : i32
    return %arg0, %c0_i32, %c0_i32_0 : i32, i32, i32
  }
  func.func @transform_1(%arg0: i32) -> (i32, i32) {
    %c0_i32 = arith.constant 0 : i32
    %c0_i32_0 = arith.constant 0 : i32
    %c0_i32_1 = arith.constant 0 : i32
    return %c0_i32, %c0_i32_0 : i32, i32
  }
  func.func @transform_2(%arg0: i32) -> (i32, i32) {
    %c0_i32 = arith.constant 0 : i32
    %c0_i32_0 = arith.constant 0 : i32
    %c0_i32_1 = arith.constant 0 : i32
    return %c0_i32, %c0_i32_0 : i32, i32
  }
  func.func @transform_3(%arg0: i32) -> (i32, i32) {
    %c0_i32 = arith.constant 0 : i32
    %c0_i32_0 = arith.constant 0 : i32
    %c0_i32_1 = arith.constant 0 : i32
    return %c0_i32, %c0_i32_0 : i32, i32
  }
  func.func @transform_4(%arg0: i32) -> (i32, i32) {
    %c0_i32 = arith.constant 0 : i32
    %c0_i32_0 = arith.constant 0 : i32
    %c0_i32_1 = arith.constant 0 : i32
    return %c0_i32, %c0_i32_0 : i32, i32
  }
  func.func @transform_5(%arg0: i32) -> (i32, i32, i32) {
    %c0_i32 = arith.constant 0 : i32
    %c0_i32_0 = arith.constant 0 : i32
    %c0_i32_1 = arith.constant 0 : i32
    return %arg0, %c0_i32, %c0_i32_0 : i32, i32, i32
  }
}

</mosaic_0001>

<llo_original>
// kernel: confidence_scorer.1
$region0: #{confidence_scorer.1}
  #allocation0 [shape = 'u32[]', space=smem, size = 0x4, offset = 0x4, fixed_abs, tag = 'smem constant byte address 0x4 - core index']
  #allocation1 [shape = 'u32[144,128]{1,0:T(1,128)}', space=vmem, size = 0x12000, scoped, tag = 'internal scratch']
  %s0 = inlined_call_operand.vmem [shape: bf16[2,160,128], index: 0, kind: input, shape index: {}]
  %s1 = inlined_call_operand.vmem [shape: bf16[32,160], index: 1, kind: input, shape index: {}]
  %s2 = inlined_call_operand.vmem [shape: bf16[16,32], index: 2, kind: input, shape index: {}]
  %s3 = inlined_call_operand.vmem [shape: bf16[16,16], index: 3, kind: input, shape index: {}]
  %s4 = inlined_call_operand.vmem [shape: f32[81,1], index: 4, kind: input, shape index: {}]
  %s5 = inlined_call_operand.hbm [shape: f32[2,1,128], index: 5, kind: output, shape index: {}]
  %s6 = sld [smem:[#allocation0]]
  $region53: #{confidence_scorer.1} parent=0
    _
  %s8 = ssub.s32 1, %s6
  %s9 = scalar_select 0, %s8, %s6
  $region1: #{confidence_scorer.1} parent=0
    #allocation2 [shape = 'u8[1024]{0}', space=vmem, size = 0x400, scoped, tag = 'output window, operand 0']
    #allocation3 [shape = 's32[2]{0}', space=sflag, size = 0x8, scoped, tag = 'scoped memory for confidence_scorer.1']
    %10 = vsyncpa [#allocation3], 0
    %s11 = scalar_lea.sflag [#allocation3], 1
    %12 = vsyncpa %s11, 0
    loop: start=0, step=1, limit=4
    $region2: #{confidence_scorer.1} parent=1 // loop_pre_header
      _
    $region3: #{confidence_scorer.1} parent=1 // loop_header
      %s14 = sphi 0, %s18
      %p15 = scmp.ge.s32.totalorder %s14, 4
      %s24 = sphi 0, %s26
      %s27 = sphi 0, %s24
      %s28 = sphi 0, %s27
      %s44 = sphi 0, %s28
      %s48 = sphi 0, %s48
      %s50 = sphi 0, %s48
      %s51 = sphi 0, %s50
      %s65 = sphi 0, %s51
      %s69 = sphi 0, %s69
      %s71 = sphi 0, %s69
      %s72 = sphi 0, %s71
      %s86 = sphi 0, %s72
      %s90 = sphi 0, %s90
      %s92 = sphi 0, %s90
      %s93 = sphi 0, %s92
      %s107 = sphi 0, %s93
      %s111 = sphi 0, %s111
      %s113 = sphi 0, %s111
      %s114 = sphi 0, %s113
      %s128 = sphi 0, %s114
      %s134 = sphi 0, %s136
      %s137 = sphi 0, %s134
      %s138 = sphi 0, %s137
      %s154 = sphi 0, %s138
    $region4: #{confidence_scorer.1} parent=1 // loop_header_branch
      %17 = sbr.rel (%p15) target = $region8
    $region5: #{confidence_scorer.1} parent=1 // loop_body
      %s19 = ssub.s32 %s14, 1
      %s20 = ssub.s32 %s14, 2
      %s21 = sadd.s32 %s14, 1
      %s22 = ssub.s32 %s14, %s21
      %p23 = scmp.eq.s32.totalorder %s22, 0
      %s25 = sadd.s32 %s24, 1
      %s26 = scalar_select %p23, %s24, %s25
      %p29 = pneg %p23
      %p30 = scmp.eq.s32.totalorder %s14, 1
      %p31 = por %p29, %p30
      %p32 = scmp.ne.s32.totalorder %s24, %s27
      %p33 = scmp.eq.s32.totalorder %s14, 0
      %p34 = por %p32, %p33
      %p35 = scmp.ne.s32.totalorder %s24, %s27
      %p36 = scmp.eq.s32.totalorder %s19, 1
      %p37 = por %p35, %p36
      %p38 = scmp.ne.s32.totalorder %s27, %s28
      %p39 = scmp.eq.s32.totalorder %s19, 0
      %p40 = por %p38, %p39
      %p41 = scmp.ne.s32.totalorder %s27, %s28
      %p42 = scmp.eq.s32.totalorder %s20, 1
      %p43 = por %p41, %p42
      %p45 = scmp.ne.s32.totalorder %s28, %s44
      %p46 = scmp.eq.s32.totalorder %s20, 0
      %p47 = por %p45, %p46
      %s49 = sadd.s32 %s48, 1
      %p52 = scmp.eq.s32.totalorder %s14, 1
      %p53 = scmp.ne.s32.totalorder %s48, %s50
      %p54 = scmp.eq.s32.totalorder %s14, 0
      %p55 = por %p53, %p54
      %p56 = scmp.ne.s32.totalorder %s48, %s50
      %p57 = scmp.eq.s32.totalorder %s19, 1
      %p58 = por %p56, %p57
      %p59 = scmp.ne.s32.totalorder %s50, %s51
      %p60 = scmp.eq.s32.totalorder %s19, 0
      %p61 = por %p59, %p60
      %p62 = scmp.ne.s32.totalorder %s50, %s51
      %p63 = scmp.eq.s32.totalorder %s20, 1
      %p64 = por %p62, %p63
      %p66 = scmp.ne.s32.totalorder %s51, %s65
      %p67 = scmp.eq.s32.totalorder %s20, 0
      %p68 = por %p66, %p67
      %s70 = sadd.s32 %s69, 1
      %p73 = scmp.eq.s32.totalorder %s14, 1
      %p74 = scmp.ne.s32.totalorder %s69, %s71
      %p75 = scmp.eq.s32.totalorder %s14, 0
      %p76 = por %p74, %p75
      %p77 = scmp.ne.s32.totalorder %s69, %s71
      %p78 = scmp.eq.s32.totalorder %s19, 1
      %p79 = por %p77, %p78
      %p80 = scmp.ne.s32.totalorder %s71, %s72
      %p81 = scmp.eq.s32.totalorder %s19, 0
      %p82 = por %p80, %p81
      %p83 = scmp.ne.s32.totalorder %s71, %s72
      %p84 = scmp.eq.s32.totalorder %s20, 1
      %p85 = por %p83, %p84
      %p87 = scmp.ne.s32.totalorder %s72, %s86
      %p88 = scmp.eq.s32.totalorder %s20, 0
      %p89 = por %p87, %p88
      %s91 = sadd.s32 %s90, 1
      %p94 = scmp.eq.s32.totalorder %s14, 1
      %p95 = scmp.ne.s32.totalorder %s90, %s92
      %p96 = scmp.eq.s32.totalorder %s14, 0
      %p97 = por %p95, %p96
      %p98 = scmp.ne.s32.totalorder %s90, %s92
      %p99 = scmp.eq.s32.totalorder %s19, 1
      %p100 = por %p98, %p99
      %p101 = scmp.ne.s32.totalorder %s92, %s93
      %p102 = scmp.eq.s32.totalorder %s19, 0
      %p103 = por %p101, %p102
      %p104 = scmp.ne.s32.totalorder %s92, %s93
      %p105 = scmp.eq.s32.totalorder %s20, 1
      %p106 = por %p104, %p105
      %p108 = scmp.ne.s32.totalorder %s93, %s107
      %p109 = scmp.eq.s32.totalorder %s20, 0
      %p110 = por %p108, %p109
      %s112 = sadd.s32 %s111, 1
      %p115 = scmp.eq.s32.totalorder %s14, 1
      %p116 = scmp.ne.s32.totalorder %s111, %s113
      %p117 = scmp.eq.s32.totalorder %s14, 0
      %p118 = por %p116, %p117
      %p119 = scmp.ne.s32.totalorder %s111, %s113
      %p120 = scmp.eq.s32.totalorder %s19, 1
      %p121 = por %p119, %p120
      %p122 = scmp.ne.s32.totalorder %s113, %s114
      %p123 = scmp.eq.s32.totalorder %s19, 0
      %p124 = por %p122, %p123
      %p125 = scmp.ne.s32.totalorder %s113, %s114
      %p126 = scmp.eq.s32.totalorder %s20, 1
      %p127 = por %p125, %p126
      %p129 = scmp.ne.s32.totalorder %s114, %s128
      %p130 = scmp.eq.s32.totalorder %s20, 0
      %p131 = por %p129, %p130
      %s132 = ssub.s32 %s14, %s21
      %p133 = scmp.eq.s32.totalorder %s132, 0
      %s135 = sadd.s32 %s134, 1
      %s136 = scalar_select %p133, %s134, %s135
      %p139 = pneg %p133
      %p140 = scmp.eq.s32.totalorder %s14, 1
      %p141 = por %p139, %p140
      %p142 = scmp.ne.s32.totalorder %s134, %s137
      %p143 = scmp.eq.s32.totalorder %s14, 0
      %p144 = por %p142, %p143
      %p145 = scmp.ne.s32.totalorder %s134, %s137
      %p146 = scmp.eq.s32.totalorder %s19, 1
      %p147 = por %p145, %p146
      %p148 = scmp.ne.s32.totalorder %s137, %s138
      %p149 = scmp.eq.s32.totalorder %s19, 0
      %p150 = por %p148, %p149
      %p151 = scmp.ne.s32.totalorder %s137, %s138
      %p152 = scmp.eq.s32.totalorder %s20, 1
      %p153 = por %p151, %p152
      %p155 = scmp.ne.s32.totalorder %s138, %s154
      %p156 = scmp.eq.s32.totalorder %s20, 0
      %p157 = por %p155, %p156
      %p158 = scmp.le.s32.totalorder 1, %s14
      %p159 = scmp.lt.s32.totalorder %s14, 3
      %p160 = pnand %p158, %p159
      %p161 = pneg %p160
      // Predicated region
      $region9: #{confidence_scorer.1} parent=5 // pred_check
        _
      $region10: #{confidence_scorer.1} parent=5 // pred_check_branch
        %163 = sbr.rel (%p160) target = $region12
      $region11: #{confidence_scorer.1} parent=5 // pred_region
        %s164 = ssub.s32 %s14, 1
        // Predicated region
        $region13: #{confidence_scorer.1} parent=11 // pred_check
          %p165 = pneg %p61
        $region14: #{confidence_scorer.1} parent=11 // pred_check_branch
          %167 = sbr.rel (%p165) target = $region16
        $region15: #{confidence_scorer.1} parent=11 // pred_region
          _
        $region16: #{confidence_scorer.1} parent=11 // pred_fallthru
          _
        // Predicated region
        $region17: #{confidence_scorer.1} parent=11 // pred_check
          %p168 = pneg %p82
        $region18: #{confidence_scorer.1} parent=11 // pred_check_branch
          %170 = sbr.rel (%p168) target = $region20
        $region19: #{confidence_scorer.1} parent=11 // pred_region
          _
        $region20: #{confidence_scorer.1} parent=11 // pred_fallthru
          _
        // Predicated region
        $region21: #{confidence_scorer.1} parent=11 // pred_check
          %p171 = pneg %p103
        $region22: #{confidence_scorer.1} parent=11 // pred_check_branch
          %173 = sbr.rel (%p171) target = $region24
        $region23: #{confidence_scorer.1} parent=11 // pred_region
          _
        $region24: #{confidence_scorer.1} parent=11 // pred_fallthru
          _
        // Predicated region
        $region25: #{confidence_scorer.1} parent=11 // pred_check
          %p174 = pneg %p124
        $region26: #{confidence_scorer.1} parent=11 // pred_check_branch
          %176 = sbr.rel (%p174) target = $region28
        $region27: #{confidence_scorer.1} parent=11 // pred_region
          _
        $region28: #{confidence_scorer.1} parent=11 // pred_fallthru
          _
      $region12: #{confidence_scorer.1} parent=5 // pred_fallthru
        _
      %p177 = scmp.lt.s32.totalorder %s14, 2
      // Predicated region
      $region29: #{confidence_scorer.1} parent=5 // pred_check
        %p178 = pneg %p177
      $region30: #{confidence_scorer.1} parent=5 // pred_check_branch
        %180 = sbr.rel (%p178) target = $region32
      $region31: #{confidence_scorer.1} parent=5 // pred_region
        // Predicated region
        $region33: #{confidence_scorer.1} parent=31 // pred_check
          %p181 = pneg %p34
        $region34: #{confidence_scorer.1} parent=31 // pred_check_branch
          %183 = sbr.rel (%p181) target = $region36
        $region35: #{confidence_scorer.1} parent=31 // pred_region
          %p184 = scmp.lt.s32.totalorder %s14, 1
          %s185 = scalar_select %p184, %s14, 1
          %s186 = smul.addr %s185, 20
          %s187 = smul.addr %s186, 4
          %s188 = scalar_lea.vmem %s0, %s187
        $region36: #{confidence_scorer.1} parent=31 // pred_fallthru
          _
      $region32: #{confidence_scorer.1} parent=5 // pred_fallthru
        _
      %p189 = scmp.le.s32.totalorder 1, %s14
      %p190 = scmp.lt.s32.totalorder %s14, 3
      %p191 = pnand %p189, %p190
      %p192 = pneg %p191
      // Predicated region
      $region37: #{confidence_scorer.1} parent=5 // pred_check
        _
      $region38: #{confidence_scorer.1} parent=5 // pred_check_branch
        %194 = sbr.rel (%p191) target = $region40
      $region39: #{confidence_scorer.1} parent=5 // pred_region
        %s195 = ssub.s32 %s14, 1
        %p196 = scmp.lt.s32.totalorder %s19, 1
        %s197 = scalar_select %p196, %s19, 1
        %s198 = smul.addr %s197, 20
        %s199 = smul.addr %s198, 4
        %s200 = scalar_lea.vmem %s0, %s199
        %p201 = pneg %p40
        %p202 = pneg %p37
        %p203 = pneg %p61
        %p204 = pneg %p58
        %p205 = pneg %p82
        %p206 = pneg %p79
        %p207 = pneg %p103
        %p208 = pneg %p100
        %p209 = pneg %p124
        %p210 = pneg %p121
        %p211 = pneg %p150
        %p212 = pneg %p147
        %s213 = sand.u32 %s137, 1
        %s214 = scalar_lea.sflag [#allocation3], %s213
        %s215 = sand.u32 %s137, 1
        %s216 = scalar_lea.vmem [#allocation2], %s215
        %p217 = scmp.lt.s32.totalorder %s19, 1
        %s218 = scalar_select %p217, %s19, 1
        %s219 = smul.addr %s218, 20
        %s220 = smul.addr %s219, 4
        %s221 = scalar_lea.vmem %s0, %s220
        %v223 = vld [vmem:[%s4] sm:$0xff]
        %v224 = vld [vmem:[%s4 + $0x8] sm:$0xff]
        %v225 = vld [vmem:[%s4 + $0x10] sm:$0xff]
        %v226 = vld [vmem:[%s4 + $0x18] sm:$0xff]
        %v227 = vld [vmem:[%s4 + $0x20] sm:$0xff]
        %v228 = vld [vmem:[%s4 + $0x28] sm:$0xff]
        %v229 = vld [vmem:[%s4 + $0x30] sm:$0xff]
        %v230 = vld [vmem:[%s4 + $0x38] sm:$0xff]
        %v231 = vld [vmem:[%s4 + $0x40] sm:$0xff]
        %v232 = vld [vmem:[%s4 + $0x48] sm:$0xff]
        %v233 = vld [vmem:[%s4 + $0x50] sm:$0x1]
        %v234 = vld [vmem:[%s221] sm:$0xf]
        %v235 = vld [vmem:[%s221 + $0x4] sm:$0xf]
        %v236 = vld [vmem:[%s221 + $0x8] sm:$0xf]
        %v237 = vld [vmem:[%s221 + $0xc] sm:$0xf]
        %v238 = vld [vmem:[%s221 + $0x10] sm:$0xf]
        %v239 = vld [vmem:[%s221 + $0x14] sm:$0xf]
        %v240 = vld [vmem:[%s221 + $0x18] sm:$0xf]
        %v241 = vld [vmem:[%s221 + $0x1c] sm:$0xf]
        %v242 = vld [vmem:[%s221 + $0x20] sm:$0xf]
        %v243 = vld [vmem:[%s221 + $0x24] sm:$0xf]
        %v244 = vld [vmem:[%s221 + $0x28] sm:$0xf]
        %v245 = vld [vmem:[%s221 + $0x2c] sm:$0xf]
        %v246 = vld [vmem:[%s221 + $0x30] sm:$0xf]
        %v247 = vld [vmem:[%s221 + $0x34] sm:$0xf]
        %v248 = vld [vmem:[%s221 + $0x38] sm:$0xf]
        %v249 = vld [vmem:[%s221 + $0x3c] sm:$0xf]
        %v250 = vld [vmem:[%s221 + $0x40] sm:$0xf]
        %v251 = vld [vmem:[%s221 + $0x44] sm:$0xf]
        %v252 = vld [vmem:[%s221 + $0x48] sm:$0xf]
        %v253 = vld [vmem:[%s221 + $0x4c] sm:$0xf]
        %v254 = vld [vmem:[%s1] sm:$0xff]
        %v255 = vld [vmem:[%s1 + $0x8] sm:$0xff]
        %v256 = vld [vmem:[%s1 + $0x10] sm:$0xff]
        %v257 = vld [vmem:[%s1 + $0x18] sm:$0xff]
        %259 = vset.pattern.permute.xlu0 0
        %260 = vperm.xlu0 %259, %v223
        %v261 = vpop.permute.xlu0 %260
        %264 = vset.pattern.permute.xlu0 0
        %265 = vperm.xlu0 %264, %v224
        %v266 = vpop.permute.xlu0 %265
        %269 = vset.pattern.permute.xlu0 0
        %270 = vperm.xlu0 %269, %v225
        %v271 = vpop.permute.xlu0 %270
        %274 = vset.pattern.permute.xlu0 0
        %275 = vperm.xlu0 %274, %v226
        %v276 = vpop.permute.xlu0 %275
        %v282 = vunpack.c.l.b16 %v254
        %v283 = vunpack.c.h.b16 %v254
        %v284 = vunpack.c.l.b16 %v255
        %v285 = vunpack.c.h.b16 %v255
        %v286 = vunpack.c.l.b16 %v256
        %v287 = vunpack.c.h.b16 %v256
        %v288 = vunpack.c.l.b16 %v257
        %v289 = vunpack.c.h.b16 %v257
        %v290 = vpack.c.b16 %v284, %v282
        %v291 = vpack.c.b16 %v285, %v283
        %v292 = vpack.c.b16 %v288, %v286
        %v293 = vpack.c.b16 %v289, %v287
        %v316 = vunpack.c.l.b16 %v234
        %v317 = vunpack.c.l.b16 %v235
        %v318 = vunpack.c.l.b16 %v236
        %v319 = vunpack.c.l.b16 %v237
        %v320 = vunpack.c.l.b16 %v238
        %v321 = vunpack.c.l.b16 %v239
        %v322 = vunpack.c.l.b16 %v240
        %v323 = vunpack.c.l.b16 %v241
        %v324 = vunpack.c.l.b16 %v242
        %v325 = vunpack.c.l.b16 %v243
        %v326 = vunpack.c.l.b16 %v244
        %v327 = vunpack.c.l.b16 %v245
        %v328 = vunpack.c.l.b16 %v246
        %v329 = vunpack.c.l.b16 %v247
        %v330 = vunpack.c.l.b16 %v248
        %v331 = vunpack.c.l.b16 %v249
        %v332 = vunpack.c.l.b16 %v250
        %v333 = vunpack.c.l.b16 %v251
        %v334 = vunpack.c.l.b16 %v252
        %v335 = vunpack.c.l.b16 %v253
        %v336 = vpack.c.b16 %v317, %v316
        %v337 = vpack.c.b16 %v319, %v318
        %v338 = vpack.c.b16 %v321, %v320
        %v339 = vpack.c.b16 %v323, %v322
        %v340 = vpack.c.b16 %v325, %v324
        %v341 = vpack.c.b16 %v327, %v326
        %v342 = vpack.c.b16 %v329, %v328
        %v343 = vpack.c.b16 %v331, %v330
        %v344 = vpack.c.b16 %v333, %v332
        %v345 = vpack.c.b16 %v335, %v334
        %vm356 = vcmask 261120
        %v358 = vsel %vm356, %v291, 0
        %v361 = vsel %vm356, %v293, 0
        %363 = vmatprep.subr.bf16.mxu0 0
        %364 = vmatpush1.bf16.msra.mxu0 %v336
        %365 = vmatprep.subr.bf16.mxu0 0
        %366 = vmatpush1.bf16.msra.mxu0 %v337
        %367 = vmatprep.subr.bf16.mxu0 0
        %368 = vmatpush1.bf16.msra.mxu0 %v338
        %369 = vmatprep.subr.bf16.mxu0 0
        %370 = vmatpush1.bf16.msra.mxu0 %v339
        %371 = vmatprep.subr.bf16.mxu0 0
        %372 = vmatpush1.bf16.msra.mxu0 %v340
        %373 = vmatprep.subr.bf16.mxu0 0
        %374 = vmatpush1.bf16.msra.mxu0 %v341
        %375 = vmatprep.subr.bf16.mxu0 0
        %376 = vmatpush1.bf16.msra.mxu0 %v342
        %377 = vmatprep.subr.bf16.mxu0 0
        %378 = vmatpush1.bf16.msra.mxu0 %v343
        %379 = vmatprep.subr.bf16.mxu0 0
        %380 = vmatpush1.bf16.msra.mxu0 %v344
        %381 = vmatprep.subr.bf16.mxu0 0
        %382 = vmatpush1.bf16.msra.mxu0 %v345
        %383 = vmatprep.subr.bf16.mxu0 0
        %384 = vmatpush1.bf16.msra.mxu0 0
        %385 = vmatprep.subr.bf16.mxu0 0
        %386 = vmatpush1.bf16.msra.mxu0 0
        %387 = vmatprep.subr.bf16.mxu0 0
        %388 = vmatpush1.bf16.msra.mxu0 0
        %389 = vmatprep.subr.bf16.mxu0 0
        %390 = vmatpush1.bf16.msra.mxu0 0
        %391 = vmatprep.subr.bf16.mxu0 0
        %392 = vmatpush1.bf16.msra.mxu0 0
        %393 = vmatprep.subr.bf16.mxu0 0
        %394 = vmatpush1.bf16.msra.mxu0 0
        %395 = vmatprep.mubr.bf16.mxu0 %v358
        %396 = vmatmul.mubr.bf16.gmra.mrb[0].mxu0 %v290
        %v397 = vpop.f32.mrb[0].mxu0
        %v398 = vadd.f32 %v261, %v397
        %v399 = vpop.f32.mrb[0].mxu0
        %v400 = vpop.f32.mrb[0].mxu0
        %v401 = vadd.f32 %v266, %v400
        %v402 = vpop.f32.mrb[0].mxu0
        %403 = vmatprep.mubr.bf16.mxu0 %v361
        %404 = vmatmul.mubr.bf16.gmra.mrb[0].mxu0 %v292
        %v405 = vpop.f32.mrb[0].mxu0
        %v406 = vadd.f32 %v271, %v405
        %v407 = vpop.f32.mrb[0].mxu0
        %v408 = vpop.f32.mrb[0].mxu0
        %v409 = vadd.f32 %v276, %v408
        %v410 = vpop.f32.mrb[0].mxu0
        %411 = vdwg.mxu0
        %v412 = vmax.f32 %v398, 0.0
        %v413 = vmax.f32 %v401, 0.0
        %v414 = vmax.f32 %v406, 0.0
        %v415 = vmax.f32 %v409, 0.0
        %v416 = vld [vmem:[%s2] sm:$0xf]
        %v417 = vld [vmem:[%s2 + $0x4] sm:$0xf]
        %v418 = vpack.c.bf16 %v413, %v412
        %v419 = vpack.c.bf16 %v415, %v414
        %421 = vset.pattern.permute.xlu0 0
        %422 = vperm.xlu0 %421, %v227
        %v423 = vpop.permute.xlu0 %422
        %426 = vset.pattern.permute.xlu0 0
        %427 = vperm.xlu0 %426, %v228
        %v428 = vpop.permute.xlu0 %427
        %v432 = vunpack.c.l.b16 %v416
        %v433 = vunpack.c.l.b16 %v417
        %v434 = vpack.c.b16 %v433, %v432
        %v436 = vsel %vm356, %v434, 0
        %438 = vmatprep.subr.bf16.mxu0 0
        %439 = vmatpush1.bf16.msra.mxu0 %v418
        %440 = vmatprep.subr.bf16.mxu0 0
        %441 = vmatpush1.bf16.msra.mxu0 %v419
        %442 = vmatprep.subr.bf16.mxu0 0
        %443 = vmatpush1.bf16.msra.mxu0 0
        %444 = vmatprep.subr.bf16.mxu0 0
        %445 = vmatpush1.bf16.msra.mxu0 0
        %446 = vmatprep.subr.bf16.mxu0 0
        %447 = vmatpush1.bf16.msra.mxu0 0
        %448 = vmatprep.subr.bf16.mxu0 0
        %449 = vmatpush1.bf16.msra.mxu0 0
        %450 = vmatprep.subr.bf16.mxu0 0
        %451 = vmatpush1.bf16.msra.mxu0 0
        %452 = vmatprep.subr.bf16.mxu0 0
        %453 = vmatpush1.bf16.msra.mxu0 0
        %454 = vmatprep.subr.bf16.mxu0 0
        %455 = vmatpush1.bf16.msra.mxu0 0
        %456 = vmatprep.subr.bf16.mxu0 0
        %457 = vmatpush1.bf16.msra.mxu0 0
        %458 = vmatprep.subr.bf16.mxu0 0
        %459 = vmatpush1.bf16.msra.mxu0 0
        %460 = vmatprep.subr.bf16.mxu0 0
        %461 = vmatpush1.bf16.msra.mxu0 0
        %462 = vmatprep.subr.bf16.mxu0 0
        %463 = vmatpush1.bf16.msra.mxu0 0
        %464 = vmatprep.subr.bf16.mxu0 0
        %465 = vmatpush1.bf16.msra.mxu0 0
        %466 = vmatprep.subr.bf16.mxu0 0
        %467 = vmatpush1.bf16.msra.mxu0 0
        %468 = vmatprep.subr.bf16.mxu0 0
        %469 = vmatpush1.bf16.msra.mxu0 0
        %470 = vmatprep.mubr.bf16.mxu0 0
        %471 = vmatmul.mubr.bf16.gmra.mrb[0].mxu0 %v436
        %v472 = vpop.f32.mrb[0].mxu0
        %v473 = vadd.f32 %v423, %v472
        %v474 = vpop.f32.mrb[0].mxu0
        %v475 = vpop.f32.mrb[0].mxu0
        %v476 = vadd.f32 %v428, %v475
        %v477 = vpop.f32.mrb[0].mxu0
        %478 = vdwg.mxu0
        %v479 = vmax.f32 %v473, 0.0
        %v480 = vmax.f32 %v476, 0.0
        %v481 = vld [vmem:[%s3] sm:$0xf]
        %v482 = vld [vmem:[%s3 + $0x4] sm:$0xf]
        %v483 = vpack.c.bf16 %v480, %v479
        %485 = vset.pattern.permute.xlu0 0
        %486 = vperm.xlu0 %485, %v229
        %v487 = vpop.permute.xlu0 %486
        %490 = vset.pattern.permute.xlu0 0
        %491 = vperm.xlu0 %490, %v230
        %v492 = vpop.permute.xlu0 %491
        %v496 = vunpack.c.l.b16 %v481
        %v497 = vunpack.c.l.b16 %v482
        %v498 = vpack.c.b16 %v497, %v496
        %vm499 = vcmask 130048
        %v501 = vsel %vm499, %v498, 0
        %503 = vmatprep.subr.bf16.mxu0 0
        %504 = vmatpush1.bf16.msra.mxu0 %v483
        %505 = vmatprep.subr.bf16.mxu0 0
        %506 = vmatpush1.bf16.msra.mxu0 0
        %507 = vmatprep.subr.bf16.mxu0 0
        %508 = vmatpush1.bf16.msra.mxu0 0
        %509 = vmatprep.subr.bf16.mxu0 0
        %510 = vmatpush1.bf16.msra.mxu0 0
        %511 = vmatprep.subr.bf16.mxu0 0
        %512 = vmatpush1.bf16.msra.mxu0 0
        %513 = vmatprep.subr.bf16.mxu0 0
        %514 = vmatpush1.bf16.msra.mxu0 0
        %515 = vmatprep.subr.bf16.mxu0 0
        %516 = vmatpush1.bf16.msra.mxu0 0
        %517 = vmatprep.subr.bf16.mxu0 0
        %518 = vmatpush1.bf16.msra.mxu0 0
        %519 = vmatprep.subr.bf16.mxu0 0
        %520 = vmatpush1.bf16.msra.mxu0 0
        %521 = vmatprep.subr.bf16.mxu0 0
        %522 = vmatpush1.bf16.msra.mxu0 0
        %523 = vmatprep.subr.bf16.mxu0 0
        %524 = vmatpush1.bf16.msra.mxu0 0
        %525 = vmatprep.subr.bf16.mxu0 0
        %526 = vmatpush1.bf16.msra.mxu0 0
        %527 = vmatprep.subr.bf16.mxu0 0
        %528 = vmatpush1.bf16.msra.mxu0 0
        %529 = vmatprep.subr.bf16.mxu0 0
        %530 = vmatpush1.bf16.msra.mxu0 0
        %531 = vmatprep.subr.bf16.mxu0 0
        %532 = vmatpush1.bf16.msra.mxu0 0
        %533 = vmatprep.subr.bf16.mxu0 0
        %534 = vmatpush1.bf16.msra.mxu0 0
        %535 = vmatprep.mubr.bf16.mxu0 0
        %536 = vmatmul.mubr.bf16.gmra.mrb[0].mxu0 %v501
        %v537 = vpop.f32.mrb[0].mxu0
        %v538 = vadd.f32 %v487, %v537
        %v539 = vpop.f32.mrb[0].mxu0
        %v540 = vpop.f32.mrb[0].mxu0
        %v541 = vadd.f32 %v492, %v540
        %v542 = vpop.f32.mrb[0].mxu0
        %543 = vdwg.mxu0
        %v544 = vmax.f32 %v538, 0.0
        %v545 = vmax.f32 %v541, 0.0
        %547 = vset.pattern.permute.xlu0 0
        %548 = vperm.xlu0 %547, %v231
        %v549 = vpop.permute.xlu0 %548
        %552 = vset.pattern.permute.xlu0 0
        %553 = vperm.xlu0 %552, %v232
        %v554 = vpop.permute.xlu0 %553
        %v556 = vmul.f32 %v544, %v549
        %v557 = vmul.f32 %v545, %v554
        %v558 = vadd.f32 %v556, %v557
        %v559 = vrot.slane %v558, 4
        %v560 = vadd.f32 %v558, %v559
        %v561 = vrot.slane %v560, 2
        %v562 = vadd.f32 %v560, %v561
        %v563 = vrot.slane %v562, 1
        %v564 = vadd.f32 %v562, %v563
        %566 = vset.pattern.permute.xlu0 0
        %567 = vperm.xlu0 %566, %v233
        %v568 = vpop.permute.xlu0 %567
        %v570 = vadd.f32 %v564, %v568
        %571 = vst [vmem:[%s216] sm:$0x1] %v570
        %s572 = sand.u32 %s137, 1
        %s573 = scalar_lea.sflag [#allocation3], %s572
        %s574 = sand.u32 %s137, 1
        %s575 = scalar_lea.vmem [#allocation2], %s574
        // Predicated region
        $region41: #{confidence_scorer.1} parent=39 // pred_check
          %p576 = pneg %p147
        $region42: #{confidence_scorer.1} parent=39 // pred_check_branch
          %578 = sbr.rel (%p576) target = $region44
        $region43: #{confidence_scorer.1} parent=39 // pred_region
          %s580 = ssub.s32 16, 16
          %581 = vsyncadd %s573, %s580
          %s582 = smul.addr %s19, 16
          %s583 = scalar_lea.hbm %s5, %s582
          %s585 = sshll.u32 %s575, 4
          %s586 = int_to_ptr.vmem [resolvable:$true] %s585
          %588 = dma.vmem_to_hbm [thread:$0]  %s586, 16, %s583, %s573
        $region44: #{confidence_scorer.1} parent=39 // pred_fallthru
          _
      $region40: #{confidence_scorer.1} parent=5 // pred_fallthru
        _
      %p589 = scmp.le.s32.totalorder 2, %s14
      // Predicated region
      $region45: #{confidence_scorer.1} parent=5 // pred_check
        %p590 = pneg %p589
      $region46: #{confidence_scorer.1} parent=5 // pred_check_branch
        %592 = sbr.rel (%p590) target = $region48
      $region47: #{confidence_scorer.1} parent=5 // pred_region
        %s593 = ssub.s32 %s14, 2
        // Predicated region
        $region49: #{confidence_scorer.1} parent=47 // pred_check
          %p594 = pneg %p153
        $region50: #{confidence_scorer.1} parent=47 // pred_check_branch
          %596 = sbr.rel (%p594) target = $region52
        $region51: #{confidence_scorer.1} parent=47 // pred_region
          %s597 = sand.u32 %s138, 1
          %s598 = scalar_lea.sflag [#allocation3], %s597
          %s599 = sand.u32 %s138, 1
          %s600 = scalar_lea.vmem [#allocation2], %s599
          %601 = dma.done %s598, 16
        $region52: #{confidence_scorer.1} parent=47 // pred_fallthru
          _
      $region48: #{confidence_scorer.1} parent=5 // pred_fallthru
        _
    $region6: #{confidence_scorer.1} parent=1 // loop_footer
      %s18 = sadd.s32 1, %s14
    $region7: #{confidence_scorer.1} parent=1 // loop_footer_branch
      %13 = sbr.rel target = $region3
    $region8: #{confidence_scorer.1} parent=1 // loop_exit
      _
    %602 = vsyncpa [#allocation3], 1
    %s603 = scalar_lea.sflag [#allocation3], 1
    %604 = vsyncpa %s603, 1

</llo_original>
